<compile_context>
chip_gen: v5e
topology: v5e:2x2
jax: 0.10.0
libtpu: 0.0.40
codegen_flags: <defaults>
</compile_context>

<pallas_src>
import jax
import jax.numpy as jnp
from jax.experimental import pallas as pl
from jax.experimental.pallas import tpu as pltpu


def _affine_kernel(a_ref, base_ref, b_ref, o_ref):
    # out = a * base + b  (pure VPU fused multiply-add; kernel is HBM-bound)
    a = a_ref[0]        # (1, tile_ch, tile_s): drop the "half" axis
    b = b_ref[0]
    o_ref[...] = (a * base_ref[...] + b).astype(o_ref.dtype)


def _largest_divisor(n, limit, multiple_of=1):
    """Largest d <= limit that divides n and is a multiple of `multiple_of`."""
    limit = max(1, min(n, limit))
    for d in range(limit, 0, -1):
        if n % d == 0 and d % multiple_of == 0:
            return d
    return 0


def affine_operator(base_network_output, plugin_output,
                    *, target_block_bytes=2 * 1024 * 1024):
    """Pallas implementation of AffineOperator.forward.

    base_network_output: [B, C, H, W]
    plugin_output:       [B, 2*C, H, W]
    returns:             [B, C, H, W]
    """
    B, C2, H, W = plugin_output.shape
    C = C2 // 2
    assert C2 == 2 * C, "plugin_output channel count must be even"
    assert base_network_output.shape == (B, C, H, W)

    S = H * W
    out_dtype = jnp.result_type(base_network_output.dtype, plugin_output.dtype)

    # Free, contiguous reshapes only — no channel-split materialization.
    plugin4 = plugin_output.reshape(B, 2, C, S)   # [:, 0] == a-half, [:, 1] == b-half
    base3 = base_network_output.reshape(B, C, S)

    itemsizes = [jnp.dtype(plugin_output.dtype).itemsize,
                 jnp.dtype(base_network_output.dtype).itemsize,
                 jnp.dtype(out_dtype).itemsize]
    itemsize = max(itemsizes)
    sublane_q = {4: 8, 2: 16, 1: 32}.get(min(itemsizes), 8)

    # Lane (spatial) tile: large multiple of 128 dividing S, else full extent.
    if S % 128 == 0:
        tile_s = _largest_divisor(S, 2048, 128)
    else:
        tile_s = S  # full extent always satisfies the (8,128) layout rule

    # Sublane (channel) tile: biggest aligned divisor of C that keeps one
    # block under the budget; fall back to full C if no aligned divisor.
    max_ch = max(1, target_block_bytes // (tile_s * itemsize))
    if C % sublane_q == 0:
        tile_ch = _largest_divisor(C, max_ch, sublane_q)
        if tile_ch == 0:
            tile_ch = sublane_q
    else:
        tile_ch = C

    # If the channel block was forced to full extent and is too big, shrink
    # the lane tile (keeping it a multiple of 128 dividing S).
    while (tile_ch * tile_s * itemsize > target_block_bytes
           and tile_s % 256 == 0):
        tile_s //= 2

    grid = (B, C // tile_ch, S // tile_s)

    ab_block = (1, 1, tile_ch, tile_s)
    a_spec = pl.BlockSpec(ab_block, lambda bt, ct, st: (bt, 0, ct, st))
    b_spec = pl.BlockSpec(ab_block, lambda bt, ct, st: (bt, 1, ct, st))
    base_spec = pl.BlockSpec((1, tile_ch, tile_s), lambda bt, ct, st: (bt, ct, st))
    out_spec = pl.BlockSpec((1, tile_ch, tile_s), lambda bt, ct, st: (bt, ct, st))

    block_bytes = tile_ch * tile_s * itemsize
    # 4 refs x 2 pipeline buffers + headroom, clamped so it also fits v7x's
    # 64 MiB physical VMEM.
    vmem_limit = min(48 * 1024 * 1024,
                     max(32 * 1024 * 1024, 8 * block_bytes + 4 * 1024 * 1024))

    out3 = pl.pallas_call(
        _affine_kernel,
        out_shape=jax.ShapeDtypeStruct((B, C, S), out_dtype),
        grid_spec=pl.GridSpec(
            grid=grid,
            in_specs=[a_spec, base_spec, b_spec],
            out_specs=out_spec,
        ),
        compiler_params=pltpu.CompilerParams(
            dimension_semantics=("parallel", "parallel", "parallel"),
            vmem_limit_bytes=vmem_limit,
        ),
    )(plugin4, base3, plugin4)

    return out3.reshape(B, C, H, W)


if __name__ == "__main__":
    key = jax.random.PRNGKey(0)
    k_base, k_plugin = jax.random.split(key)

    B, C, H, W = 2, 4, 16, 16
    base = jax.random.normal(k_base, (B, C, H, W), dtype=jnp.float32)
    plugin = jax.random.normal(k_plugin, (B, 2 * C, H, W), dtype=jnp.float32)

    out = affine_operator(base, plugin)
    out = jax.block_until_ready(out)

    # Reference check (plain JAX) for the same semantics.
    ref = plugin[:, :C] * base + plugin[:, C:]
    assert out.shape == (B, C, H, W)
    assert out.dtype == ref.dtype
    assert jnp.allclose(out, ref, atol=1e-6, rtol=1e-6)

    print("KERNEL_OK")
</pallas_src>

<mosaic_0001>
module attributes {stable_mosaic.version = 11 : i64} {
  func.func @_affine_kernel(%arg0: i32, %arg1: i32, %arg2: i32, %arg3: memref<1x1x4x256xf32, #tpu.memory_space<vmem>>, %arg4: memref<1x4x256xf32, #tpu.memory_space<vmem>>, %arg5: memref<1x1x4x256xf32, #tpu.memory_space<vmem>>, %arg6: memref<1x4x256xf32, #tpu.memory_space<vmem>>) attributes {dimension_semantics = [#tpu.dimension_semantics<parallel>, #tpu.dimension_semantics<parallel>, #tpu.dimension_semantics<parallel>], iteration_bounds = array<i64: 2, 1, 1>, scalar_prefetch = 0 : i64, scratch_operands = 0 : i64, tpu.core_type = #tpu.core_type<tc>, window_params = [{transform_indices = @transform_0, window_bounds = array<i64: 1, 1, 4, 256>}, {transform_indices = @transform_1, window_bounds = array<i64: 1, 4, 256>}, {transform_indices = @transform_2, window_bounds = array<i64: 1, 1, 4, 256>}, {transform_indices = @transform_3, window_bounds = array<i64: 1, 4, 256>}]} {
    %c0 = arith.constant 0 : index
    %c0_0 = arith.constant 0 : index
    %c0_1 = arith.constant 0 : index
    %c0_2 = arith.constant 0 : index
    %0 = vector.load %arg3[%c0, %c0_0, %c0_1, %c0_2] : memref<1x1x4x256xf32, #tpu.memory_space<vmem>>, vector<1x1x4x256xf32>
    %1 = vector.shape_cast %0 : vector<1x1x4x256xf32> to vector<1x4x256xf32>
    %c0_3 = arith.constant 0 : index
    %c0_4 = arith.constant 0 : index
    %c0_5 = arith.constant 0 : index
    %c0_6 = arith.constant 0 : index
    %2 = vector.load %arg5[%c0_3, %c0_4, %c0_5, %c0_6] : memref<1x1x4x256xf32, #tpu.memory_space<vmem>>, vector<1x1x4x256xf32>
    %3 = vector.shape_cast %2 : vector<1x1x4x256xf32> to vector<1x4x256xf32>
    %c0_7 = arith.constant 0 : index
    %c0_8 = arith.constant 0 : index
    %c0_9 = arith.constant 0 : index
    %4 = vector.load %arg4[%c0_7, %c0_8, %c0_9] : memref<1x4x256xf32, #tpu.memory_space<vmem>>, vector<1x4x256xf32>
    %5 = arith.mulf %1, %4 : vector<1x4x256xf32>
    %6 = arith.addf %5, %3 : vector<1x4x256xf32>
    %c0_10 = arith.constant 0 : index
    %c0_11 = arith.constant 0 : index
    %c0_12 = arith.constant 0 : index
    %7 = vector.load %arg6[%c0_10, %c0_11, %c0_12] : memref<1x4x256xf32, #tpu.memory_space<vmem>>, vector<1x4x256xf32>
    tpu.vector_store %arg6[%c0_10, %c0_11, %c0_12], %6 {strides = array<i32>} : memref<1x4x256xf32, #tpu.memory_space<vmem>>, vector<1x4x256xf32>,
    return
  }
  func.func @transform_0(%arg0: i32, %arg1: i32, %arg2: i32) -> (i32, i32, i32, i32) {
    %c0_i32 = arith.constant 0 : i32
    %c0_i32_0 = arith.constant 0 : i32
    return %arg0, %c0_i32, %arg1, %arg2 : i32, i32, i32, i32
  }
  func.func @transform_1(%arg0: i32, %arg1: i32, %arg2: i32) -> (i32, i32, i32) {
    %c0_i32 = arith.constant 0 : i32
    return %arg0, %arg1, %arg2 : i32, i32, i32
  }
  func.func @transform_2(%arg0: i32, %arg1: i32, %arg2: i32) -> (i32, i32, i32, i32) {
    %c1_i32 = arith.constant 1 : i32
    %c0_i32 = arith.constant 0 : i32
    return %arg0, %c1_i32, %arg1, %arg2 : i32, i32, i32, i32
  }
  func.func @transform_3(%arg0: i32, %arg1: i32, %arg2: i32) -> (i32, i32, i32) {
    %c0_i32 = arith.constant 0 : i32
    return %arg0, %arg1, %arg2 : i32, i32, i32
  }
}

</mosaic_0001>

<llo_original>
// kernel: tpu_custom_call.1
$region0: #{tpu_custom_call.1}
  #allocation0 [shape = 'u32[]', space=smem, size = 0x4, offset = 0x4, fixed_abs, tag = 'smem constant byte address 0x4 - core index']
  #allocation1 [shape = 'u32[72,128]{1,0:T(1,128)}', space=vmem, size = 0x9000, scoped, tag = 'internal scratch']
  %s0 = inlined_call_operand.hbm [shape: f32[2,2,4,256], index: 0, kind: input, shape index: {}]
  %s1 = inlined_call_operand.hbm [shape: f32[2,4,256], index: 1, kind: input, shape index: {}]
  %s2 = inlined_call_operand.hbm [shape: f32[2,2,4,256], index: 2, kind: input, shape index: {}]
  %s3 = inlined_call_operand.hbm [shape: f32[2,4,256], index: 3, kind: output, shape index: {}]
  %s4 = sld [smem:[#allocation0]]
  $region57: #{tpu_custom_call.1} parent=0
    _
  %s6 = ssub.s32 1, %s4
  %s7 = scalar_select 0, %s6, %s4
  $region1: #{tpu_custom_call.1} parent=0
    #allocation2 [shape = 'u8[8192]{0}', space=vmem, size = 0x2000, scoped, tag = 'input window, operand 0']
    #allocation3 [shape = 's32[2]{0}', space=sflag, size = 0x8, scoped, tag = 'scoped memory for tpu_custom_call.1']
    #allocation4 [shape = 's32[2]{0}', space=sflag, size = 0x8, scoped, tag = 'scoped memory for tpu_custom_call.1']
    #allocation5 [shape = 'u8[8192]{0}', space=vmem, size = 0x2000, scoped, tag = 'input window, operand 1']
    #allocation6 [shape = 's32[2]{0}', space=sflag, size = 0x8, scoped, tag = 'scoped memory for tpu_custom_call.1']
    #allocation7 [shape = 'u8[8192]{0}', space=vmem, size = 0x2000, scoped, tag = 'input window, operand 2']
    #allocation8 [shape = 'u8[8192]{0}', space=vmem, size = 0x2000, scoped, tag = 'output window, operand 0']
    %8 = vsyncpa [#allocation3], 0
    %s9 = scalar_lea.sflag [#allocation3], 1
    %10 = vsyncpa %s9, 0
    %11 = vsyncpa [#allocation6], 0
    %s12 = scalar_lea.sflag [#allocation6], 1
    %13 = vsyncpa %s12, 0
    %14 = vsyncpa [#allocation4], 0
    %s15 = scalar_lea.sflag [#allocation4], 1
    %16 = vsyncpa %s15, 0
    loop: start=0, step=1, limit=4
    $region2: #{tpu_custom_call.1} parent=1 // loop_pre_header
      _
    $region3: #{tpu_custom_call.1} parent=1 // loop_header
      %s18 = sphi 0, %s22
      %p19 = scmp.ge.s32.totalorder %s18, 4
      %s25 = sphi 0, %s44
      %s26 = sphi 0, %s40
      %s27 = sphi 0, %s36
      %s28 = sphi 0, %s25
      %s29 = sphi 0, %s26
      %s30 = sphi 0, %s27
      %s31 = sphi 0, %s28
      %s32 = sphi 0, %s29
      %s33 = sphi 0, %s30
      %s51 = sphi 0, %s53
      %s54 = sphi 0, %s51
      %s55 = sphi 0, %s54
      %s71 = sphi 0, %s55
      %s81 = sphi 0, %s83
      %s84 = sphi 0, %s81
      %s85 = sphi 0, %s84
      %s101 = sphi 0, %s85
      %s111 = sphi 0, %s113
      %s114 = sphi 0, %s111
      %s115 = sphi 0, %s114
      %s131 = sphi 0, %s115
      %s141 = sphi 0, %s143
      %s144 = sphi 0, %s141
      %s145 = sphi 0, %s144
      %s161 = sphi 0, %s145
    $region4: #{tpu_custom_call.1} parent=1 // loop_header_branch
      %21 = sbr.rel (%p19) target = $region8
    $region5: #{tpu_custom_call.1} parent=1 // loop_body
      %s23 = ssub.s32 %s18, 1
      %s24 = ssub.s32 %s18, 2
      %s34 = sadd.s32 1, %s27
      %p35 = scmp.ge.s32.totalorder %s34, 1
      %s36 = scalar_select %p35, 0, %s34
      %s37 = sadd.s32 1, %s26
      %s38 = scalar_select %p35, %s37, %s26
      %p39 = scmp.ge.s32.totalorder %s38, 1
      %s40 = scalar_select %p39, 0, %s38
      %s41 = sadd.s32 1, %s25
      %s42 = scalar_select %p39, %s41, %s25
      %p43 = scmp.ge.s32.totalorder %s42, 2
      %s44 = scalar_select %p43, 0, %s42
      %s45 = ssub.s32 %s25, %s44
      %s46 = ssub.s32 %s26, %s40
      %s47 = sor.u32 %s45, %s46
      %s48 = ssub.s32 %s27, %s36
      %s49 = sor.u32 %s47, %s48
      %p50 = scmp.eq.s32.totalorder %s49, 0
      %s52 = sadd.s32 %s51, 1
      %s53 = scalar_select %p50, %s51, %s52
      %p56 = pneg %p50
      %p57 = scmp.eq.s32.totalorder %s18, 1
      %p58 = por %p56, %p57
      %p59 = scmp.ne.s32.totalorder %s51, %s54
      %p60 = scmp.eq.s32.totalorder %s18, 0
      %p61 = por %p59, %p60
      %p62 = scmp.ne.s32.totalorder %s51, %s54
      %p63 = scmp.eq.s32.totalorder %s23, 1
      %p64 = por %p62, %p63
      %p65 = scmp.ne.s32.totalorder %s54, %s55
      %p66 = scmp.eq.s32.totalorder %s23, 0
      %p67 = por %p65, %p66
      %p68 = scmp.ne.s32.totalorder %s54, %s55
      %p69 = scmp.eq.s32.totalorder %s24, 1
      %p70 = por %p68, %p69
      %p72 = scmp.ne.s32.totalorder %s55, %s71
      %p73 = scmp.eq.s32.totalorder %s24, 0
      %p74 = por %p72, %p73
      %s75 = ssub.s32 %s25, %s44
      %s76 = ssub.s32 %s26, %s40
      %s77 = sor.u32 %s75, %s76
      %s78 = ssub.s32 %s27, %s36
      %s79 = sor.u32 %s77, %s78
      %p80 = scmp.eq.s32.totalorder %s79, 0
      %s82 = sadd.s32 %s81, 1
      %s83 = scalar_select %p80, %s81, %s82
      %p86 = pneg %p80
      %p87 = scmp.eq.s32.totalorder %s18, 1
      %p88 = por %p86, %p87
      %p89 = scmp.ne.s32.totalorder %s81, %s84
      %p90 = scmp.eq.s32.totalorder %s18, 0
      %p91 = por %p89, %p90
      %p92 = scmp.ne.s32.totalorder %s81, %s84
      %p93 = scmp.eq.s32.totalorder %s23, 1
      %p94 = por %p92, %p93
      %p95 = scmp.ne.s32.totalorder %s84, %s85
      %p96 = scmp.eq.s32.totalorder %s23, 0
      %p97 = por %p95, %p96
      %p98 = scmp.ne.s32.totalorder %s84, %s85
      %p99 = scmp.eq.s32.totalorder %s24, 1
      %p100 = por %p98, %p99
      %p102 = scmp.ne.s32.totalorder %s85, %s101
      %p103 = scmp.eq.s32.totalorder %s24, 0
      %p104 = por %p102, %p103
      %s105 = ssub.s32 %s25, %s44
      %s106 = ssub.s32 %s26, %s40
      %s107 = sor.u32 %s105, %s106
      %s108 = ssub.s32 %s27, %s36
      %s109 = sor.u32 %s107, %s108
      %p110 = scmp.eq.s32.totalorder %s109, 0
      %s112 = sadd.s32 %s111, 1
      %s113 = scalar_select %p110, %s111, %s112
      %p116 = pneg %p110
      %p117 = scmp.eq.s32.totalorder %s18, 1
      %p118 = por %p116, %p117
      %p119 = scmp.ne.s32.totalorder %s111, %s114
      %p120 = scmp.eq.s32.totalorder %s18, 0
      %p121 = por %p119, %p120
      %p122 = scmp.ne.s32.totalorder %s111, %s114
      %p123 = scmp.eq.s32.totalorder %s23, 1
      %p124 = por %p122, %p123
      %p125 = scmp.ne.s32.totalorder %s114, %s115
      %p126 = scmp.eq.s32.totalorder %s23, 0
      %p127 = por %p125, %p126
      %p128 = scmp.ne.s32.totalorder %s114, %s115
      %p129 = scmp.eq.s32.totalorder %s24, 1
      %p130 = por %p128, %p129
      %p132 = scmp.ne.s32.totalorder %s115, %s131
      %p133 = scmp.eq.s32.totalorder %s24, 0
      %p134 = por %p132, %p133
      %s135 = ssub.s32 %s25, %s44
      %s136 = ssub.s32 %s26, %s40
      %s137 = sor.u32 %s135, %s136
      %s138 = ssub.s32 %s27, %s36
      %s139 = sor.u32 %s137, %s138
      %p140 = scmp.eq.s32.totalorder %s139, 0
      %s142 = sadd.s32 %s141, 1
      %s143 = scalar_select %p140, %s141, %s142
      %p146 = pneg %p140
      %p147 = scmp.eq.s32.totalorder %s18, 1
      %p148 = por %p146, %p147
      %p149 = scmp.ne.s32.totalorder %s141, %s144
      %p150 = scmp.eq.s32.totalorder %s18, 0
      %p151 = por %p149, %p150
      %p152 = scmp.ne.s32.totalorder %s141, %s144
      %p153 = scmp.eq.s32.totalorder %s23, 1
      %p154 = por %p152, %p153
      %p155 = scmp.ne.s32.totalorder %s144, %s145
      %p156 = scmp.eq.s32.totalorder %s23, 0
      %p157 = por %p155, %p156
      %p158 = scmp.ne.s32.totalorder %s144, %s145
      %p159 = scmp.eq.s32.totalorder %s24, 1
      %p160 = por %p158, %p159
      %p162 = scmp.ne.s32.totalorder %s145, %s161
      %p163 = scmp.eq.s32.totalorder %s24, 0
      %p164 = por %p162, %p163
      %p165 = scmp.le.s32.totalorder 1, %s18
      %p166 = scmp.lt.s32.totalorder %s18, 3
      %p167 = pnand %p165, %p166
      %p168 = pneg %p167
      // Predicated region
      $region9: #{tpu_custom_call.1} parent=5 // pred_check
        _
      $region10: #{tpu_custom_call.1} parent=5 // pred_check_branch
        %170 = sbr.rel (%p167) target = $region12
      $region11: #{tpu_custom_call.1} parent=5 // pred_region
        %s171 = ssub.s32 %s18, 1
      $region12: #{tpu_custom_call.1} parent=5 // pred_fallthru
        _
      %p172 = scmp.lt.s32.totalorder %s18, 2
      // Predicated region
      $region13: #{tpu_custom_call.1} parent=5 // pred_check
        %p173 = pneg %p172
      $region14: #{tpu_custom_call.1} parent=5 // pred_check_branch
        %175 = sbr.rel (%p173) target = $region16
      $region15: #{tpu_custom_call.1} parent=5 // pred_region
        // Predicated region
        $region17: #{tpu_custom_call.1} parent=15 // pred_check
          %p176 = pneg %p61
        $region18: #{tpu_custom_call.1} parent=15 // pred_check_branch
          %178 = sbr.rel (%p176) target = $region20
        $region19: #{tpu_custom_call.1} parent=15 // pred_region
          %s179 = sand.u32 %s51, 1
          %s180 = scalar_lea.sflag [#allocation3], %s179
          %s181 = sand.u32 %s51, 1
          %s182 = smul.addr %s181, 8
          %s183 = scalar_lea.vmem [#allocation2], %s182
          %s184 = smul.u32 2, %s27
          %186 = vsyncadd %s180, 0
          %s187 = smul.addr %s26, 2
          %s188 = sadd.s32 %s184, %s187
          %s189 = smul.addr %s25, 4
          %s190 = sadd.s32 %s188, %s189
          %s191 = smul.addr %s190, 4
          %s192 = scalar_lea.hbm %s0, %s191
          %s194 = sshll.u32 %s192, 4
          %s195 = int_to_ptr.hbm [resolvable:$true] %s194
          %s196 = sshll.u32 %s183, 4
          %s197 = int_to_ptr.vmem [resolvable:$true] %s196
          %199 = dma.hbm_to_vmem [thread:$0]  %s195, 128, %s197, %s180
        $region20: #{tpu_custom_call.1} parent=15 // pred_fallthru
          _
        // Predicated region
        $region21: #{tpu_custom_call.1} parent=15 // pred_check
          %p200 = pneg %p91
        $region22: #{tpu_custom_call.1} parent=15 // pred_check_branch
          %202 = sbr.rel (%p200) target = $region24
        $region23: #{tpu_custom_call.1} parent=15 // pred_region
          %s203 = sand.u32 %s18, 1
          %s204 = scalar_lea.sflag [#allocation6], %s203
          %s205 = sand.u32 %s81, 1
          %s206 = smul.addr %s205, 8
          %s207 = scalar_lea.vmem [#allocation5], %s206
          %s208 = smul.u32 2, %s27
          %210 = vsyncadd %s204, 0
          %s211 = smul.addr %s26, 2
          %s212 = sadd.s32 %s208, %s211
          %s213 = smul.addr %s25, 2
          %s214 = sadd.s32 %s212, %s213
          %s215 = smul.addr %s214, 4
          %s216 = scalar_lea.hbm %s1, %s215
          %s218 = sshll.u32 %s216, 4
          %s219 = int_to_ptr.hbm [resolvable:$true] %s218
          %s220 = sshll.u32 %s207, 4
          %s221 = int_to_ptr.vmem [resolvable:$true] %s220
          %223 = dma.hbm_to_vmem [thread:$0]  %s219, 128, %s221, %s204
        $region24: #{tpu_custom_call.1} parent=15 // pred_fallthru
          _
        // Predicated region
        $region25: #{tpu_custom_call.1} parent=15 // pred_check
          %p224 = pneg %p121
        $region26: #{tpu_custom_call.1} parent=15 // pred_check_branch
          %226 = sbr.rel (%p224) target = $region28
        $region27: #{tpu_custom_call.1} parent=15 // pred_region
          %s227 = sand.u32 %s18, 1
          %s228 = scalar_lea.sflag [#allocation6], %s227
          %s229 = sand.u32 %s111, 1
          %s230 = smul.addr %s229, 8
          %s231 = scalar_lea.vmem [#allocation7], %s230
          %s232 = smul.u32 2, %s27
          %234 = vsyncadd %s228, 0
          %s235 = smul.addr %s26, 2
          %s236 = sadd.s32 %s232, %s235
          %s237 = sadd.s32 %s236, 2
          %s238 = smul.addr %s25, 4
          %s239 = sadd.s32 %s237, %s238
          %s240 = smul.addr %s239, 4
          %s241 = scalar_lea.hbm %s2, %s240
          %s243 = sshll.u32 %s241, 4
          %s244 = int_to_ptr.hbm [resolvable:$true] %s243
          %s245 = sshll.u32 %s231, 4
          %s246 = int_to_ptr.vmem [resolvable:$true] %s245
          %248 = dma.hbm_to_vmem [thread:$0]  %s244, 128, %s246, %s228
        $region28: #{tpu_custom_call.1} parent=15 // pred_fallthru
          _
      $region16: #{tpu_custom_call.1} parent=5 // pred_fallthru
        _
      %p249 = scmp.le.s32.totalorder 1, %s18
      %p250 = scmp.lt.s32.totalorder %s18, 3
      %p251 = pnand %p249, %p250
      %p252 = pneg %p251
      // Predicated region
      $region29: #{tpu_custom_call.1} parent=5 // pred_check
        _
      $region30: #{tpu_custom_call.1} parent=5 // pred_check_branch
        %254 = sbr.rel (%p251) target = $region32
      $region31: #{tpu_custom_call.1} parent=5 // pred_region
        %s255 = ssub.s32 %s18, 1
        %s256 = sand.u32 %s54, 1
        %s257 = scalar_lea.sflag [#allocation3], %s256
        %s258 = sand.u32 %s54, 1
        %s259 = smul.addr %s258, 8
        %s260 = scalar_lea.vmem [#allocation2], %s259
        // Predicated region
        $region33: #{tpu_custom_call.1} parent=31 // pred_check
          %p261 = pneg %p67
        $region34: #{tpu_custom_call.1} parent=31 // pred_check_branch
          %263 = sbr.rel (%p261) target = $region36
        $region35: #{tpu_custom_call.1} parent=31 // pred_region
          %265 = dma.done %s257, 128
        $region36: #{tpu_custom_call.1} parent=31 // pred_fallthru
          _
        %s266 = sand.u32 %s23, 1
        %s267 = scalar_lea.sflag [#allocation6], %s266
        %s268 = sand.u32 %s84, 1
        %s269 = smul.addr %s268, 8
        %s270 = scalar_lea.vmem [#allocation5], %s269
        // Predicated region
        $region37: #{tpu_custom_call.1} parent=31 // pred_check
          %p271 = pneg %p97
        $region38: #{tpu_custom_call.1} parent=31 // pred_check_branch
          %273 = sbr.rel (%p271) target = $region40
        $region39: #{tpu_custom_call.1} parent=31 // pred_region
          %275 = dma.done %s267, 128
        $region40: #{tpu_custom_call.1} parent=31 // pred_fallthru
          _
        %s276 = sand.u32 %s23, 1
        %s277 = scalar_lea.sflag [#allocation6], %s276
        %s278 = sand.u32 %s114, 1
        %s279 = smul.addr %s278, 8
        %s280 = scalar_lea.vmem [#allocation7], %s279
        // Predicated region
        $region41: #{tpu_custom_call.1} parent=31 // pred_check
          %p281 = pneg %p127
        $region42: #{tpu_custom_call.1} parent=31 // pred_check_branch
          %283 = sbr.rel (%p281) target = $region44
        $region43: #{tpu_custom_call.1} parent=31 // pred_region
          %285 = dma.done %s277, 128
        $region44: #{tpu_custom_call.1} parent=31 // pred_fallthru
          _
        %s286 = sand.u32 %s54, 1
        %s287 = scalar_lea.sflag [#allocation3], %s286
        %s288 = sand.u32 %s54, 1
        %s289 = smul.addr %s288, 8
        %s290 = scalar_lea.vmem [#allocation2], %s289
        %p291 = pneg %p67
        %p292 = pneg %p64
        %s293 = sand.u32 %s23, 1
        %s294 = scalar_lea.sflag [#allocation6], %s293
        %s295 = sand.u32 %s84, 1
        %s296 = smul.addr %s295, 8
        %s297 = scalar_lea.vmem [#allocation5], %s296
        %p298 = pneg %p97
        %p299 = pneg %p94
        %s300 = sand.u32 %s23, 1
        %s301 = scalar_lea.sflag [#allocation6], %s300
        %s302 = sand.u32 %s114, 1
        %s303 = smul.addr %s302, 8
        %s304 = scalar_lea.vmem [#allocation7], %s303
        %p305 = pneg %p127
        %p306 = pneg %p124
        %p307 = pneg %p157
        %p308 = pneg %p154
        %s309 = sand.u32 %s144, 1
        %s310 = scalar_lea.sflag [#allocation4], %s309
        %s311 = sand.u32 %s144, 1
        %s312 = smul.addr %s311, 8
        %s313 = scalar_lea.vmem [#allocation8], %s312
        %s314 = smul.u32 2, %s30
        %s315 = smul.u32 2, %s30
        %s316 = smul.u32 2, %s30
        %s317 = smul.u32 2, %s30
        %v318 = vld [vmem:[%s260] sm:$0xff]
        %v319 = vld [vmem:[%s280] sm:$0xff]
        %v320 = vld [vmem:[%s270] sm:$0xff]
        %v321 = vmul.f32 %v318, %v320
        %v322 = vadd.f32 %v321, %v319
        %323 = vst [vmem:[%s313] sm:$0xff] %v322
        %s324 = sand.u32 %s144, 1
        %s325 = scalar_lea.sflag [#allocation4], %s324
        %s326 = sand.u32 %s144, 1
        %s327 = smul.addr %s326, 8
        %s328 = scalar_lea.vmem [#allocation8], %s327
        // Predicated region
        $region45: #{tpu_custom_call.1} parent=31 // pred_check
          %p329 = pneg %p154
        $region46: #{tpu_custom_call.1} parent=31 // pred_check_branch
          %331 = sbr.rel (%p329) target = $region48
        $region47: #{tpu_custom_call.1} parent=31 // pred_region
          %s332 = smul.u32 2, %s30
          %334 = vsyncadd %s325, 0
          %s335 = smul.addr %s29, 2
          %s336 = sadd.s32 %s332, %s335
          %s337 = smul.addr %s28, 2
          %s338 = sadd.s32 %s336, %s337
          %s339 = smul.addr %s338, 4
          %s340 = scalar_lea.hbm %s3, %s339
          %s342 = sshll.u32 %s328, 4
          %s343 = int_to_ptr.vmem [resolvable:$true] %s342
          %s344 = sshll.u32 %s340, 4
          %s345 = int_to_ptr.hbm [resolvable:$true] %s344
          %347 = dma.vmem_to_hbm [thread:$0]  %s343, 128, %s345, %s325
        $region48: #{tpu_custom_call.1} parent=31 // pred_fallthru
          _
      $region32: #{tpu_custom_call.1} parent=5 // pred_fallthru
        _
      %p348 = scmp.le.s32.totalorder 2, %s18
      // Predicated region
      $region49: #{tpu_custom_call.1} parent=5 // pred_check
        %p349 = pneg %p348
      $region50: #{tpu_custom_call.1} parent=5 // pred_check_branch
        %351 = sbr.rel (%p349) target = $region52
      $region51: #{tpu_custom_call.1} parent=5 // pred_region
        %s352 = ssub.s32 %s18, 2
        // Predicated region
        $region53: #{tpu_custom_call.1} parent=51 // pred_check
          %p353 = pneg %p160
        $region54: #{tpu_custom_call.1} parent=51 // pred_check_branch
          %355 = sbr.rel (%p353) target = $region56
        $region55: #{tpu_custom_call.1} parent=51 // pred_region
          %s356 = sand.u32 %s145, 1
          %s357 = scalar_lea.sflag [#allocation4], %s356
          %s358 = sand.u32 %s145, 1
          %s359 = smul.addr %s358, 8
          %s360 = scalar_lea.vmem [#allocation8], %s359
          %362 = dma.done %s357, 128
        $region56: #{tpu_custom_call.1} parent=51 // pred_fallthru
          _
      $region52: #{tpu_custom_call.1} parent=5 // pred_fallthru
        _
    $region6: #{tpu_custom_call.1} parent=1 // loop_footer
      %s22 = sadd.s32 1, %s18
    $region7: #{tpu_custom_call.1} parent=1 // loop_footer_branch
      %17 = sbr.rel target = $region3
    $region8: #{tpu_custom_call.1} parent=1 // loop_exit
      _
    %363 = vsyncpa [#allocation3], 1
    %s364 = scalar_lea.sflag [#allocation3], 1
    %365 = vsyncpa %s364, 1
    %366 = vsyncpa [#allocation6], 1
    %s367 = scalar_lea.sflag [#allocation6], 1
    %368 = vsyncpa %s367, 1
    %369 = vsyncpa [#allocation4], 1
    %s370 = scalar_lea.sflag [#allocation4], 1
    %371 = vsyncpa %s370, 1

</llo_original>
